<compile_context>
chip_gen: v6e
topology: v6e:2x2x1
jax: 0.10.0
libtpu: 0.0.40
codegen_flags: <defaults>
</compile_context>

<pallas_src>
import jax
import jax.numpy as jnp
from jax.experimental import pallas as pl
from jax.experimental.pallas import tpu as pltpu


def _mlp_kernel(x_ref, w1_ref, bw_ref, b2_ref, o_ref):
    # x_ref:  (TB, IN)  compute dtype (f32 or bf16)   -- streamed per grid step
    # w1_ref: (IN, HP)  compute dtype                 -- VMEM resident
    # bw_ref: (2, HP)   f32, row 0 = b1, row 1 = w2   -- VMEM resident
    # b2_ref: (1, 1)    f32 scalar in SMEM
    # o_ref:  (TB, 1)   f32
    x = x_ref[...]
    # Layer 1 on the MXU, f32 accumulation.
    h = jnp.dot(x, w1_ref[...], preferred_element_type=jnp.float32)
    h = h + bw_ref[0:1, :]
    # leaky_relu, default negative_slope = 0.01 (matches F.leaky_relu).
    h = jnp.where(h > 0, h, 0.01 * h)
    # Layer 2 (50 -> 1): VPU multiply by w2 row + cross-lane (XLU) reduce.
    o = jnp.sum(h * bw_ref[1:2, :], axis=-1, keepdims=True) + b2_ref[0, 0]
    o_ref[...] = o.astype(o_ref.dtype)
    # TODO(synk): output stays (TB, 1) (masked vst); a fully lane-dense output
    # would require a batch-on-lanes relayout whose XLU cost ~= the masked
    # stores it removes for a 1-wide output, so it is intentionally skipped.


def _round_up(n, m):
    return ((n + m - 1) // m) * m


def crnet_balance_forward(x, w1, b1, w2, b2, *, block_b=1024,
                          compute_dtype=jnp.float32, hidden_pad=64):
    """Forward pass of PT_Module.

    x:  (B, 2*z_dim)
    w1: (2*z_dim, 50)   b1: (1, 50) or (50,)
    w2: (50, 1)         b2: (1, 1) or scalar
    Returns (B, 1) float32.
    """
    B, in1 = x.shape
    H = w1.shape[1]
    HP = max(hidden_pad, _round_up(H, 8))

    # Zero-pad hidden dim 50 -> HP (exact: padded hidden units are identically 0).
    w1p = jnp.zeros((in1, HP), jnp.float32).at[:, :H].set(w1.astype(jnp.float32))
    b1r = jnp.zeros((1, HP), jnp.float32).at[:, :H].set(
        jnp.asarray(b1, jnp.float32).reshape(1, H))
    w2r = jnp.zeros((1, HP), jnp.float32).at[:, :H].set(
        jnp.asarray(w2, jnp.float32).reshape(1, H))
    bw = jnp.concatenate([b1r, w2r], axis=0)           # (2, HP), VMEM resident
    b2s = jnp.asarray(b2, jnp.float32).reshape(1, 1)   # SMEM scalar

    # Operand dtype for the MXU matmul (accumulation stays f32 in-kernel).
    x_c = x.astype(compute_dtype)
    w1p = w1p.astype(compute_dtype)

    # Batch tile: multiple of 8 sublanes, capped so the (double-buffered)
    # x tile stays comfortably inside the scoped VMEM limit for wide inputs.
    bytes_per_row = in1 * jnp.dtype(compute_dtype).itemsize
    vmem_cap_rows = max(8, (4 * 1024 * 1024) // max(1, bytes_per_row))
    TB = _round_up(min(block_b, vmem_cap_rows, max(8, B)), 8)

    grid = (pl.cdiv(B, TB),)   # ragged last block: OOB reads padded, writes masked
    out = pl.pallas_call(
        _mlp_kernel,
        out_shape=jax.ShapeDtypeStruct((B, 1), jnp.float32),
        grid=grid,
        in_specs=[
            # streamed per batch tile
            pl.BlockSpec((TB, in1), lambda i: (i, 0)),
            # resident weights / packed (b1, w2) (constant index_map -> no re-DMA)
            pl.BlockSpec((in1, HP), lambda i: (0, 0)),
            pl.BlockSpec((2, HP), lambda i: (0, 0)),
            # scalar b2 in SMEM
            pl.BlockSpec(memory_space=pltpu.MemorySpace.SMEM),
        ],
        out_specs=pl.BlockSpec((TB, 1), lambda i: (i, 0)),
        compiler_params=pltpu.CompilerParams(
            dimension_semantics=("parallel",)),
    )(x_c, w1p, bw, b2s)
    return out


def init_params(key, z_dim):
    """Deterministic init mimicking PyTorch nn.Linear default
    (U[-1/sqrt(fan_in), 1/sqrt(fan_in)]), stored as (in, out)."""
    k1, k2, k3, k4 = jax.random.split(key, 4)
    in1 = z_dim * 2
    bound1 = 1.0 / jnp.sqrt(in1)
    w1 = jax.random.uniform(k1, (in1, 50), jnp.float32, -bound1, bound1)
    b1 = jax.random.uniform(k2, (1, 50), jnp.float32, -bound1, bound1)
    in2 = 50
    bound2 = 1.0 / jnp.sqrt(in2)
    w2 = jax.random.uniform(k3, (in2, 1), jnp.float32, -bound2, bound2)
    b2 = jax.random.uniform(k4, (1, 1), jnp.float32, -bound2, bound2)
    return w1, b1, w2, b2


def _reference(x, w1, b1, w2, b2):
    h = x @ w1 + b1
    h = jnp.where(h > 0, h, 0.01 * h)
    return h @ w2 + b2


if __name__ == "__main__":
    key = jax.random.PRNGKey(0)
    z_dim = 16
    batch = 8

    k_x, k_p = jax.random.split(key)
    x = jax.random.normal(k_x, (batch, z_dim * 2), jnp.float32)
    w1, b1, w2, b2 = init_params(k_p, z_dim)

    # --- f32 path, single tile, exact check -------------------------------
    out = crnet_balance_forward(x, w1, b1, w2, b2)
    out = jax.block_until_ready(out)
    ref = _reference(x, w1, b1, w2, b2)
    assert out.shape == (batch, 1)
    assert jnp.allclose(out, ref, atol=1e-5), "f32 mismatch vs reference"

    # --- bf16 operands, multi-tile ragged grid (300 rows, tile 128) -------
    B2 = 300
    x2 = jax.random.normal(jax.random.PRNGKey(1), (B2, z_dim * 2), jnp.float32)
    out2 = crnet_balance_forward(x2, w1, b1, w2, b2,
                                 block_b=128, compute_dtype=jnp.bfloat16)
    out2 = jax.block_until_ready(out2)
    ref2 = _reference(x2, w1, b1, w2, b2)
    assert out2.shape == (B2, 1)
    assert jnp.allclose(out2, ref2, atol=1e-1, rtol=1e-1), \
        "bf16 mismatch vs reference"

    print("KERNEL_OK")
</pallas_src>

<mosaic_0001>
module attributes {stable_mosaic.version = 11 : i64} {
  func.func @_mlp_kernel(%arg0: i32, %arg1: memref<8x32xf32, #tpu.memory_space<vmem>>, %arg2: memref<32x64xf32, #tpu.memory_space<vmem>>, %arg3: memref<2x64xf32, #tpu.memory_space<vmem>>, %arg4: memref<1x1xf32, #tpu.memory_space<smem>>, %arg5: memref<8x1xf32, #tpu.memory_space<vmem>>) attributes {dimension_semantics = [#tpu.dimension_semantics<parallel>], iteration_bounds = array<i64: 1>, scalar_prefetch = 0 : i64, scratch_operands = 0 : i64, tpu.core_type = #tpu.core_type<tc>, window_params = [{transform_indices = @transform_0, window_bounds = array<i64: 8, 32>}, {pipeline_mode = #tpu.pipeline_mode<synchronous>, transform_indices = @transform_1, window_bounds = array<i64: 32, 64>}, {pipeline_mode = #tpu.pipeline_mode<synchronous>, transform_indices = @transform_2, window_bounds = array<i64: 2, 64>}, {transform_indices = @transform_3, window_bounds = array<i64: 1, 1>}, {transform_indices = @transform_4, window_bounds = array<i64: 8, 1>}]} {
    %c0 = arith.constant 0 : index
    %c0_0 = arith.constant 0 : index
    %0 = vector.load %arg1[%c0, %c0_0] : memref<8x32xf32, #tpu.memory_space<vmem>>, vector<8x32xf32>
    %c0_1 = arith.constant 0 : index
    %c0_2 = arith.constant 0 : index
    %1 = vector.load %arg2[%c0_1, %c0_2] : memref<32x64xf32, #tpu.memory_space<vmem>>, vector<32x64xf32>
    %cst = arith.constant dense<0.000000e+00> : vector<8x64xf32>
    %2 = tpu.matmul %0, %1, %cst {dimension_numbers = #tpu.dot_dimension_numbers<[1], [0], [0], [1], [0, 0, 1, 1], [], []>} : vector<8x32xf32>, vector<32x64xf32>, vector<8x64xf32> -> vector<8x64xf32>
    %c0_3 = arith.constant 0 : index
    %c0_4 = arith.constant 0 : index
    %3 = vector.load %arg3[%c0_3, %c0_4] : memref<2x64xf32, #tpu.memory_space<vmem>>, vector<1x64xf32>
    %4 = vector.broadcast %3 : vector<1x64xf32> to vector<8x64xf32>
    %5 = arith.addf %2, %4 : vector<8x64xf32>
    %cst_5 = arith.constant 0.000000e+00 : f32
    %6 = vector.broadcast %cst_5 : f32 to vector<8x64xf32>
    %7 = arith.cmpf ogt, %5, %6 : vector<8x64xf32>
    %cst_6 = arith.constant 0.00999999977 : f32
    %8 = vector.broadcast %cst_6 : f32 to vector<8x64xf32>
    %9 = arith.mulf %8, %5 : vector<8x64xf32>
    %10 = arith.select %7, %5, %9 : vector<8x64xi1>, vector<8x64xf32>
    %c1 = arith.constant 1 : index
    %c0_7 = arith.constant 0 : index
    %11 = vector.load %arg3[%c1, %c0_7] : memref<2x64xf32, #tpu.memory_space<vmem>>, vector<1x64xf32>
    %12 = vector.broadcast %11 : vector<1x64xf32> to vector<8x64xf32>
    %13 = arith.mulf %10, %12 : vector<8x64xf32>
    %cst_8 = arith.constant dense<0.000000e+00> : vector<8xf32>
    %14 = vector.multi_reduction <add>, %13, %cst_8 [1] : vector<8x64xf32> to vector<8xf32>
    %15 = vector.shape_cast %14 : vector<8xf32> to vector<8x1xf32>
    %c0_9 = arith.constant 0 : index
    %c0_10 = arith.constant 0 : index
    %16 = memref.load %arg4[%c0_9, %c0_10] : memref<1x1xf32, #tpu.memory_space<smem>>
    %17 = vector.broadcast %16 : f32 to vector<8x1xf32>
    %18 = arith.addf %15, %17 : vector<8x1xf32>
    %c0_11 = arith.constant 0 : index
    %c0_12 = arith.constant 0 : index
    %19 = vector.load %arg5[%c0_11, %c0_12] : memref<8x1xf32, #tpu.memory_space<vmem>>, vector<8x1xf32>
    tpu.vector_store %arg5[%c0_11, %c0_12], %18 {strides = array<i32>} : memref<8x1xf32, #tpu.memory_space<vmem>>, vector<8x1xf32>,
    return
  }
  func.func @transform_0(%arg0: i32) -> (i32, i32) {
    %c0_i32 = arith.constant 0 : i32
    %c0_i32_0 = arith.constant 0 : i32
    return %arg0, %c0_i32 : i32, i32
  }
  func.func @transform_1(%arg0: i32) -> (i32, i32) {
    %c0_i32 = arith.constant 0 : i32
    %c0_i32_0 = arith.constant 0 : i32
    %c0_i32_1 = arith.constant 0 : i32
    return %c0_i32, %c0_i32_0 : i32, i32
  }
  func.func @transform_2(%arg0: i32) -> (i32, i32) {
    %c0_i32 = arith.constant 0 : i32
    %c0_i32_0 = arith.constant 0 : i32
    %c0_i32_1 = arith.constant 0 : i32
    return %c0_i32, %c0_i32_0 : i32, i32
  }
  func.func @transform_3(%arg0: i32) -> (i32, i32) {
    %c0_i32 = arith.constant 0 : i32
    %c0_i32_0 = arith.constant 0 : i32
    %c0_i32_1 = arith.constant 0 : i32
    return %c0_i32, %c0_i32_0 : i32, i32
  }
  func.func @transform_4(%arg0: i32) -> (i32, i32) {
    %c0_i32 = arith.constant 0 : i32
    %c0_i32_0 = arith.constant 0 : i32
    return %arg0, %c0_i32 : i32, i32
  }
}

</mosaic_0001>

<llo_original>
// kernel: tpu_custom_call.1
$region0: #{tpu_custom_call.1}
  #allocation0 [shape = 'u32[]', space=smem, size = 0x4, offset = 0x4, fixed_abs, tag = 'smem constant byte address 0x4 - core index']
  #allocation1 [shape = 'u32[144,128]{1,0:T(1,128)}', space=vmem, size = 0x12000, scoped, tag = 'internal scratch']
  #allocation2 [shape = 'f32[1,1]{1,0:T(1,128)S(6)}', space=smem, size = 0x200, scoped, tag = 'scoped memory for tpu_custom_call.1']
  %s0 = inlined_call_operand.hbm [shape: f32[8,32], index: 0, kind: input, shape index: {}]
  %s1 = inlined_call_operand.hbm [shape: f32[32,64], index: 1, kind: input, shape index: {}]
  %s2 = inlined_call_operand.vmem [shape: f32[2,64], index: 2, kind: input, shape index: {}]
  %s3 = inlined_call_operand.<no memory space> [shape: f32[1,1], index: 3, kind: input, shape index: {}]
  %s4 = inlined_call_operand.vmem [shape: f32[8,1], index: 4, kind: output, shape index: {}]
  %s5 = sld [smem:[#allocation0]]
  $region34: #{tpu_custom_call.1} parent=0
    _
  %s7 = ssub.s32 1, %s5
  %s8 = scalar_select 0, %s7, %s5
  %9 = sst [smem:[#allocation2]] %s3
  $region1: #{tpu_custom_call.1} parent=0
    #allocation3 [shape = 'u8[4096]{0}', space=vmem, size = 0x1000, scoped, tag = 'input window, operand 0, single buffered']
    #allocation4 [shape = 's32[1]{0}', space=sflag, size = 0x4, scoped, tag = 'scoped memory for tpu_custom_call.1']
    #allocation5 [shape = 'u8[16384]{0}', space=vmem, size = 0x4000, scoped, tag = 'input window, operand 1, single buffered']
    #allocation6 [shape = 's32[1]{0}', space=sflag, size = 0x4, scoped, tag = 'scoped memory for tpu_custom_call.1']
    %10 = vsyncpa [#allocation4], 0
    %11 = vsyncpa [#allocation6], 0
    // Predicated region
    $region2: #{tpu_custom_call.1} parent=1 // pred_check
      _
    $region3: #{tpu_custom_call.1} parent=1 // pred_check_branch
      %13 = sbr.rel (0) target = $region5
    $region4: #{tpu_custom_call.1} parent=1 // pred_region
      %s15 = ssub.s32 128, 128
      %16 = vsyncadd [#allocation4], %s15
      %s18 = sshll.u32 [#allocation3], 4
      %s19 = int_to_ptr.vmem [resolvable:$true] %s18
      %21 = dma.hbm_to_vmem [thread:$0]  %s0, 128, %s19, [#allocation4]
    $region5: #{tpu_custom_call.1} parent=1 // pred_fallthru
      _
    // Predicated region
    $region6: #{tpu_custom_call.1} parent=1 // pred_check
      _
    $region7: #{tpu_custom_call.1} parent=1 // pred_check_branch
      %23 = sbr.rel (0) target = $region9
    $region8: #{tpu_custom_call.1} parent=1 // pred_region
      %s25 = ssub.s32 512, 512
      %26 = vsyncadd [#allocation6], %s25
      %s27 = sshll.u32 [#allocation5], 4
      %s28 = int_to_ptr.vmem [resolvable:$true] %s27
      %33 = dma.hbm_to_vmem [thread:$0]  %s1, 512, %s28, [#allocation6], 128, 128, 8
    $region9: #{tpu_custom_call.1} parent=1 // pred_fallthru
      _
    // Predicated region
    $region10: #{tpu_custom_call.1} parent=1 // pred_check
      _
    $region11: #{tpu_custom_call.1} parent=1 // pred_check_branch
      %35 = sbr.rel (0) target = $region13
    $region12: #{tpu_custom_call.1} parent=1 // pred_region
      _
    $region13: #{tpu_custom_call.1} parent=1 // pred_fallthru
      _
    // Predicated region
    $region14: #{tpu_custom_call.1} parent=1 // pred_check
      _
    $region15: #{tpu_custom_call.1} parent=1 // pred_check_branch
      %37 = sbr.rel (0) target = $region17
    $region16: #{tpu_custom_call.1} parent=1 // pred_region
      _
    $region17: #{tpu_custom_call.1} parent=1 // pred_fallthru
      _
    // Predicated region
    $region18: #{tpu_custom_call.1} parent=1 // pred_check
      _
    $region19: #{tpu_custom_call.1} parent=1 // pred_check_branch
      %39 = sbr.rel (0) target = $region21
    $region20: #{tpu_custom_call.1} parent=1 // pred_region
      %40 = dma.done [#allocation4], 128
    $region21: #{tpu_custom_call.1} parent=1 // pred_fallthru
      _
    // Predicated region
    $region22: #{tpu_custom_call.1} parent=1 // pred_check
      _
    $region23: #{tpu_custom_call.1} parent=1 // pred_check_branch
      %42 = sbr.rel (0) target = $region25
    $region24: #{tpu_custom_call.1} parent=1 // pred_region
      %43 = dma.done [#allocation6], 512
    $region25: #{tpu_custom_call.1} parent=1 // pred_fallthru
      _
    %v44 = vld [vmem:[#allocation3] sm:$0xff]
    %v45 = vld [vmem:[#allocation5] sm:$0xff]
    %v46 = vld [vmem:[#allocation5 + $0x8] sm:$0xff]
    %v47 = vld [vmem:[#allocation5 + $0x10] sm:$0xff]
    %v48 = vld [vmem:[#allocation5 + $0x18] sm:$0xff]
    %v49 = vld [vmem:[%s2] sm:$0x1]
    %v50 = vlaneseq
    %v51 = vshrl.u32 %v50, 7
    %v52 = vsub.s32 0, %v51
    %v53 = vrot.slane %v49, %v52
    %vm54 = vcmask 261120
    %v56 = vsel %vm54, %v44, 0
    %58 = vmatprep.subr.mxu0 0.0
    %59 = vmatpush1.msra.mxu0 0.0
    %60 = vmatprep.subr.mxu0 0.0
    %61 = vmatpush1.msra.mxu0 0.0
    %62 = vmatprep.subr.mxu0 0.0
    %63 = vmatpush1.msra.mxu0 0.0
    %64 = vmatprep.subr.mxu0 0.0
    %65 = vmatpush1.msra.mxu0 0.0
    %66 = vmatprep.subr.mxu0 0.0
    %67 = vmatpush1.msra.mxu0 0.0
    %68 = vmatprep.subr.mxu0 0.0
    %69 = vmatpush1.msra.mxu0 0.0
    %70 = vmatprep.subr.mxu0 0.0
    %71 = vmatpush1.msra.mxu0 0.0
    %72 = vmatprep.subr.mxu0 0.0
    %73 = vmatpush1.msra.mxu0 0.0
    %74 = vmatprep.subr.mxu0 0.0
    %75 = vmatpush1.msra.mxu0 0.0
    %76 = vmatprep.subr.mxu0 0.0
    %77 = vmatpush1.msra.mxu0 0.0
    %78 = vmatprep.subr.mxu0 0.0
    %79 = vmatpush1.msra.mxu0 0.0
    %80 = vmatprep.subr.mxu0 0.0
    %81 = vmatpush1.msra.mxu0 0.0
    %82 = vmatprep.subr.mxu0 0.0
    %83 = vmatpush1.msra.mxu0 %v48
    %84 = vmatprep.subr.mxu0 0.0
    %85 = vmatpush1.msra.mxu0 %v47
    %86 = vmatprep.subr.mxu0 0.0
    %87 = vmatpush1.msra.mxu0 %v46
    %88 = vmatprep.subr.mxu0 0.0
    %89 = vmatpush1.msra.mxu0 %v45
    %90 = vmatprep.subr.mxu0 0.0
    %91 = vmatpush2.msra.mxu0 0.0
    %92 = vmatprep.subr.mxu0 0.0
    %93 = vmatpush2.msra.mxu0 0.0
    %94 = vmatprep.subr.mxu0 0.0
    %95 = vmatpush2.msra.mxu0 0.0
    %96 = vmatprep.subr.mxu0 0.0
    %97 = vmatpush2.msra.mxu0 0.0
    %98 = vmatprep.subr.mxu0 0.0
    %99 = vmatpush2.msra.mxu0 0.0
    %100 = vmatprep.subr.mxu0 0.0
    %101 = vmatpush2.msra.mxu0 0.0
    %102 = vmatprep.subr.mxu0 0.0
    %103 = vmatpush2.msra.mxu0 0.0
    %104 = vmatprep.subr.mxu0 0.0
    %105 = vmatpush2.msra.mxu0 0.0
    %106 = vmatprep.subr.mxu0 0.0
    %107 = vmatpush2.msra.mxu0 0.0
    %108 = vmatprep.subr.mxu0 0.0
    %109 = vmatpush2.msra.mxu0 0.0
    %110 = vmatprep.subr.mxu0 0.0
    %111 = vmatpush2.msra.mxu0 0.0
    %112 = vmatprep.subr.mxu0 0.0
    %113 = vmatpush2.msra.mxu0 0.0
    %114 = vmatprep.subr.mxu0 0.0
    %115 = vmatpush2.msra.mxu0 0.0
    %116 = vmatprep.subr.mxu0 0.0
    %117 = vmatpush2.msra.mxu0 0.0
    %118 = vmatprep.subr.mxu0 0.0
    %119 = vmatpush2.msra.mxu0 0.0
    %120 = vmatprep.subr.mxu0 0.0
    %121 = vmatpush2.msra.mxu0 0.0
    %122 = vmatprep.mubr.f32.mxu0 0.0
    %123 = vmatmul.mubr.f32.gmra.mxu0 %v56
    %v124 = vpop.f32.mrf.mxu0
    %v125 = vadd.f32 %v53, %v124
    %v126 = vpop.f32.mrf.mxu0
    %127 = vdwg.mxu0
    %vm128 = vcmp.gt.f32.partialorder %v125, 0.0
    %v129 = vmul.f32 %v125, 0.01
    %v130 = vsel %vm128, %v125, %v129
    %v131 = vld [vmem:[%s2 + $0x1] sm:$0x1]
    %v132 = vlaneseq
    %v133 = vshrl.u32 %v132, 7
    %v134 = vsub.s32 0, %v133
    %v135 = vrot.slane %v131, %v134
    %v136 = vmul.f32 %v130, %v135
    %vm137 = vcmask 523264
    %v138 = vsel %vm137, %v136, 0.0
    %139 = vadd.xlane.f32.xlu0 %v138
    %v140 = vpop.xlane.xlu0 %139
    %s141 = sld [smem:[#allocation2]]
    %v142 = vstv %s141
    %v143 = vadd.f32 %v140, %v142
    %vm144 = vcmask 7168
    %145 = vst.msk [vmem:[%s4] sm:$0xff] %vm144, %v143
    // Predicated region
    $region26: #{tpu_custom_call.1} parent=1 // pred_check
      _
    $region27: #{tpu_custom_call.1} parent=1 // pred_check_branch
      %147 = sbr.rel (0) target = $region29
    $region28: #{tpu_custom_call.1} parent=1 // pred_region
      _
    $region29: #{tpu_custom_call.1} parent=1 // pred_fallthru
      _
    // Predicated region
    $region30: #{tpu_custom_call.1} parent=1 // pred_check
      _
    $region31: #{tpu_custom_call.1} parent=1 // pred_check_branch
      %149 = sbr.rel (0) target = $region33
    $region32: #{tpu_custom_call.1} parent=1 // pred_region
      _
    $region33: #{tpu_custom_call.1} parent=1 // pred_fallthru
      _
    %150 = vsyncpa [#allocation4], 1
    %151 = vsyncpa [#allocation6], 1

</llo_original>
